<compile_context>
chip_gen: v6e
topology: v6e:2x2x1
jax: 0.10.0
libtpu: 0.0.40
codegen_flags: <defaults>
</compile_context>

<pallas_src>
import math

import jax
import jax.numpy as jnp
from jax.experimental import pallas as pl
from jax.experimental.pallas import tpu as pltpu

_HALF_LOG_2PI = 0.5 * math.log(2.0 * math.pi)

# Per-buffer tile budgets (bytes).  Chosen so worst-case double-buffered VMEM
# (x + out + mu + sigma) stays well inside every generation's default scoped
# VMEM limit; no vmem_limit override needed.
_FLAT_TILE_BYTES = 2 << 20   # path 1: only x/out are tile-sized
_ROW_TILE_BYTES = 1 << 20    # path 2: four tile-sized arrays


def gauss_log_prob_kernel(x_ref, mu_ref, sigma_ref, out_ref):
    """Elementwise Normal(mu, sigma).log_prob(x); mu/sigma broadcast over batch.

    Handles both layouts used below via jnp broadcasting:
      * flat:      x/out (TB, N),    mu/sigma (1, N)
      * row-tiled: x/out (1, TR, L), mu/sigma (TR, L)
    """
    x = x_ref[...].astype(jnp.float32)
    mu = mu_ref[...].astype(jnp.float32)
    sigma = sigma_ref[...].astype(jnp.float32)

    diff = x - mu
    var2 = 2.0 * (sigma * sigma)
    log_prob = -(diff * diff) / var2 - jnp.log(sigma) - jnp.float32(_HALF_LOG_2PI)
    out_ref[...] = log_prob.astype(out_ref.dtype)


def _cost(batch, n):
    return pl.CostEstimate(
        flops=int(7 * batch * n),
        transcendentals=int(2 * batch * n),
        bytes_accessed=int(4 * (2 * batch * n + 2 * n)),
    )


def _run_flat(x2, mu2, sig2, tb):
    B, N = x2.shape
    return pl.pallas_call(
        gauss_log_prob_kernel,
        out_shape=jax.ShapeDtypeStruct((B, N), x2.dtype),
        grid=(pl.cdiv(B, tb),),
        in_specs=[
            pl.BlockSpec((tb, N), lambda i: (i, 0)),   # x: batch-blocked
            pl.BlockSpec((1, N), lambda i: (0, 0)),    # mu: resident across grid
            pl.BlockSpec((1, N), lambda i: (0, 0)),    # sigma: resident across grid
        ],
        out_specs=pl.BlockSpec((tb, N), lambda i: (i, 0)),
        compiler_params=pltpu.CompilerParams(dimension_semantics=("parallel",)),
        cost_estimate=_cost(B, N),
    )(x2, mu2, sig2)


def _run_row_tiled(x3, mu2, sig2, tr):
    B, R0, L = x3.shape
    # Batch innermost: the mu/sigma block index is constant across the inner
    # loop, so their tile stays resident in VMEM (fetched once per row-tile).
    return pl.pallas_call(
        gauss_log_prob_kernel,
        out_shape=jax.ShapeDtypeStruct((B, R0, L), x3.dtype),
        grid=(pl.cdiv(R0, tr), B),
        in_specs=[
            pl.BlockSpec((1, tr, L), lambda r, b: (b, r, 0)),
            pl.BlockSpec((tr, L), lambda r, b: (r, 0)),
            pl.BlockSpec((tr, L), lambda r, b: (r, 0)),
        ],
        out_specs=pl.BlockSpec((1, tr, L), lambda r, b: (b, r, 0)),
        compiler_params=pltpu.CompilerParams(
            dimension_semantics=("parallel", "parallel")),
        cost_estimate=_cost(B, R0 * L),
    )(x3, mu2, sig2)


def gauss_tg_log_prob(x, mu, sigma):
    """Pallas implementation of Gauss_TG.forward(x): Normal(mu, sigma).log_prob(x).

    x: (B, *param_shape); mu/sigma: param_shape, broadcast over the batch dim.
    """
    B = x.shape[0]
    param_shape = mu.shape
    assert sigma.shape == param_shape and x.shape[1:] == param_shape
    N = math.prod(param_shape)

    x2 = x.reshape(B, N)
    mu2 = mu.reshape(1, N)
    sig2 = sigma.reshape(1, N)

    # ---- Path 1: flat (B, N) layout, batch-blocked (small/medium slabs). ------
    # Legal for any N (lane dim is the full array dim) and needs no padding.
    row_bytes = 4 * N
    cap = _FLAT_TILE_BYTES // row_bytes if row_bytes else 0
    tb = None
    if B <= cap:
        # Whole batch fits in one tile.  For B >= 16, split into >= 2 blocks
        # (multiples of 8 sublanes) so both v7x TensorCores get work.
        tb = B if B < 16 else max(8, (B // 2) // 8 * 8)
    elif cap >= 8:
        tb = (cap // 8) * 8
    if tb is not None:
        out2 = _run_flat(x2, mu2, sig2, tb)
        return out2.reshape((B,) + param_shape)

    # ---- Path 2: big parameter slab, lane-dense (R0, L) row tiling. -----------
    if N % 128 == 0:
        L = next(l for l in (512, 256, 128) if N % l == 0)
        R0 = N // L
        tr = min(R0, max(8, (_ROW_TILE_BYTES // (4 * L)) // 8 * 8))
        out3 = _run_row_tiled(x2.reshape(B, R0, L), mu2.reshape(R0, L),
                              sig2.reshape(R0, L), tr)
        return out3.reshape((B,) + param_shape)

    # ---- Path 3: rare fallback (big slab, N has no factor of 128). ------------
    # TODO(synk): pad + slice costs one extra HBM round trip; only taken when N
    # is large and not a multiple of 128.
    L = 128
    Np = ((N + L - 1) // L) * L
    pad = Np - N
    x2p = jnp.pad(x2, ((0, 0), (0, pad)))
    mu2p = jnp.pad(mu2, ((0, 0), (0, pad)))
    sig2p = jnp.pad(sig2, ((0, 0), (0, pad)), constant_values=1.0)  # keep log finite
    R0 = Np // L
    tr = min(R0, max(8, (_ROW_TILE_BYTES // (4 * L)) // 8 * 8))
    out3 = _run_row_tiled(x2p.reshape(B, R0, L), mu2p.reshape(R0, L),
                          sig2p.reshape(R0, L), tr)
    out2 = out3.reshape(B, Np)[:, :N]
    return out2.reshape((B,) + param_shape)


def reference_log_prob(x, mu, sigma):
    # Pure-JAX reference of torch.distributions.Normal(mu, sigma).log_prob(x)
    var = sigma * sigma
    return -((x - mu) ** 2) / (2.0 * var) - jnp.log(sigma) - 0.5 * jnp.log(2.0 * jnp.pi)


if __name__ == "__main__":
    B, C, H, W = 2, 4, 16, 16
    key = jax.random.PRNGKey(0)
    kx, kmu, ksig = jax.random.split(key, 3)

    # Deterministic parameter init (module stores sigma as abs(sigma_init)).
    mu = jax.random.normal(kmu, (C, H, W), dtype=jnp.float32)
    sigma = jnp.abs(jax.random.normal(ksig, (C, H, W), dtype=jnp.float32)) + 0.1
    x = jax.random.normal(kx, (B, C, H, W), dtype=jnp.float32)

    out = gauss_tg_log_prob(x, mu, sigma)
    jax.block_until_ready(out)

    ref = reference_log_prob(x, mu[None], sigma[None])
    assert out.shape == (B, C, H, W)
    assert jnp.allclose(out, ref, atol=1e-5, rtol=1e-5)

    print("KERNEL_OK")
</pallas_src>

<mosaic_0001>
module attributes {stable_mosaic.version = 11 : i64} {
  func.func @gauss_log_prob_kernel(%arg0: i32, %arg1: memref<2x1024xf32, #tpu.memory_space<vmem>>, %arg2: memref<1x1024xf32, #tpu.memory_space<vmem>>, %arg3: memref<1x1024xf32, #tpu.memory_space<vmem>>, %arg4: memref<2x1024xf32, #tpu.memory_space<vmem>>) attributes {dimension_semantics = [#tpu.dimension_semantics<parallel>], iteration_bounds = array<i64: 1>, scalar_prefetch = 0 : i64, scratch_operands = 0 : i64, tpu.core_type = #tpu.core_type<tc>, window_params = [{transform_indices = @transform_0, window_bounds = array<i64: 2, 1024>}, {pipeline_mode = #tpu.pipeline_mode<synchronous>, transform_indices = @transform_1, window_bounds = array<i64: 1, 1024>}, {pipeline_mode = #tpu.pipeline_mode<synchronous>, transform_indices = @transform_2, window_bounds = array<i64: 1, 1024>}, {transform_indices = @transform_3, window_bounds = array<i64: 2, 1024>}]} {
    %c0 = arith.constant 0 : index
    %c0_0 = arith.constant 0 : index
    %0 = vector.load %arg1[%c0, %c0_0] : memref<2x1024xf32, #tpu.memory_space<vmem>>, vector<2x1024xf32>
    %c0_1 = arith.constant 0 : index
    %c0_2 = arith.constant 0 : index
    %1 = vector.load %arg2[%c0_1, %c0_2] : memref<1x1024xf32, #tpu.memory_space<vmem>>, vector<1x1024xf32>
    %c0_3 = arith.constant 0 : index
    %c0_4 = arith.constant 0 : index
    %2 = vector.load %arg3[%c0_3, %c0_4] : memref<1x1024xf32, #tpu.memory_space<vmem>>, vector<1x1024xf32>
    %3 = vector.broadcast %1 : vector<1x1024xf32> to vector<2x1024xf32>
    %4 = arith.subf %0, %3 : vector<2x1024xf32>
    %5 = arith.mulf %2, %2 : vector<1x1024xf32>
    %cst = arith.constant 2.000000e+00 : f32
    %6 = vector.broadcast %cst : f32 to vector<1x1024xf32>
    %7 = arith.mulf %6, %5 : vector<1x1024xf32>
    %8 = arith.mulf %4, %4 : vector<2x1024xf32>
    %cst_5 = arith.constant 0.000000e+00 : f32
    %9 = vector.broadcast %cst_5 : f32 to vector<2x1024xf32>
    %10 = arith.subf %9, %8 : vector<2x1024xf32>
    %11 = vector.broadcast %7 : vector<1x1024xf32> to vector<2x1024xf32>
    %12 = arith.divf %10, %11 : vector<2x1024xf32>
    %13 = math.log %2 : vector<1x1024xf32>
    %14 = vector.broadcast %13 : vector<1x1024xf32> to vector<2x1024xf32>
    %15 = arith.subf %12, %14 : vector<2x1024xf32>
    %cst_6 = arith.constant 0.918938517 : f32
    %16 = vector.broadcast %cst_6 : f32 to vector<2x1024xf32>
    %17 = arith.subf %15, %16 : vector<2x1024xf32>
    %c0_7 = arith.constant 0 : index
    %c0_8 = arith.constant 0 : index
    %18 = vector.load %arg4[%c0_7, %c0_8] : memref<2x1024xf32, #tpu.memory_space<vmem>>, vector<2x1024xf32>
    tpu.vector_store %arg4[%c0_7, %c0_8], %17 {strides = array<i32>} : memref<2x1024xf32, #tpu.memory_space<vmem>>, vector<2x1024xf32>,
    return
  }
  func.func @transform_0(%arg0: i32) -> (i32, i32) {
    %c0_i32 = arith.constant 0 : i32
    %c0_i32_0 = arith.constant 0 : i32
    return %arg0, %c0_i32 : i32, i32
  }
  func.func @transform_1(%arg0: i32) -> (i32, i32) {
    %c0_i32 = arith.constant 0 : i32
    %c0_i32_0 = arith.constant 0 : i32
    %c0_i32_1 = arith.constant 0 : i32
    return %c0_i32, %c0_i32_0 : i32, i32
  }
  func.func @transform_2(%arg0: i32) -> (i32, i32) {
    %c0_i32 = arith.constant 0 : i32
    %c0_i32_0 = arith.constant 0 : i32
    %c0_i32_1 = arith.constant 0 : i32
    return %c0_i32, %c0_i32_0 : i32, i32
  }
  func.func @transform_3(%arg0: i32) -> (i32, i32) {
    %c0_i32 = arith.constant 0 : i32
    %c0_i32_0 = arith.constant 0 : i32
    return %arg0, %c0_i32 : i32, i32
  }
}

</mosaic_0001>

<llo_original>
// kernel: tpu_custom_call.1
$region0: #{tpu_custom_call.1}
  #allocation0 [shape = 'u32[]', space=smem, size = 0x4, offset = 0x4, fixed_abs, tag = 'smem constant byte address 0x4 - core index']
  #allocation1 [shape = 'u32[144,128]{1,0:T(1,128)}', space=vmem, size = 0x12000, scoped, tag = 'internal scratch']
  %s0 = inlined_call_operand.hbm [shape: f32[2,1024], index: 0, kind: input, shape index: {}]
  %s1 = inlined_call_operand.hbm [shape: f32[1,1024], index: 1, kind: input, shape index: {}]
  %s2 = inlined_call_operand.hbm [shape: f32[1,1024], index: 2, kind: input, shape index: {}]
  %s3 = inlined_call_operand.hbm [shape: f32[2,1024], index: 3, kind: output, shape index: {}]
  %s4 = sld [smem:[#allocation0]]
  $region34: #{tpu_custom_call.1} parent=0
    _
  %s6 = ssub.s32 1, %s4
  %s7 = scalar_select 0, %s6, %s4
  $region1: #{tpu_custom_call.1} parent=0
    #allocation2 [shape = 'u8[8192]{0}', space=vmem, size = 0x2000, scoped, tag = 'input window, operand 0, single buffered']
    #allocation3 [shape = 's32[1]{0}', space=sflag, size = 0x4, scoped, tag = 'scoped memory for tpu_custom_call.1']
    #allocation4 [shape = 's32[1]{0}', space=sflag, size = 0x4, scoped, tag = 'scoped memory for tpu_custom_call.1']
    #allocation5 [shape = 'u8[4096]{0}', space=vmem, size = 0x1000, scoped, tag = 'input window, operand 1, single buffered']
    #allocation6 [shape = 's32[1]{0}', space=sflag, size = 0x4, scoped, tag = 'scoped memory for tpu_custom_call.1']
    #allocation7 [shape = 'u8[4096]{0}', space=vmem, size = 0x1000, scoped, tag = 'input window, operand 2, single buffered']
    #allocation8 [shape = 'u8[8192]{0}', space=vmem, size = 0x2000, scoped, tag = 'output window, operand 0, single buffered']
    %8 = vsyncpa [#allocation3], 0
    %9 = vsyncpa [#allocation6], 0
    %10 = vsyncpa [#allocation4], 0
    // Predicated region
    $region2: #{tpu_custom_call.1} parent=1 // pred_check
      _
    $region3: #{tpu_custom_call.1} parent=1 // pred_check_branch
      %12 = sbr.rel (0) target = $region5
    $region4: #{tpu_custom_call.1} parent=1 // pred_region
      %s14 = ssub.s32 256, 256
      %15 = vsyncadd [#allocation3], %s14
      %s17 = sshll.u32 [#allocation2], 4
      %s18 = int_to_ptr.vmem [resolvable:$true] %s17
      %20 = dma.hbm_to_vmem [thread:$0]  %s0, 256, %s18, [#allocation3]
    $region5: #{tpu_custom_call.1} parent=1 // pred_fallthru
      _
    // Predicated region
    $region6: #{tpu_custom_call.1} parent=1 // pred_check
      _
    $region7: #{tpu_custom_call.1} parent=1 // pred_check_branch
      %22 = sbr.rel (0) target = $region9
    $region8: #{tpu_custom_call.1} parent=1 // pred_region
      %s24 = ssub.s32 128, 128
      %25 = vsyncadd [#allocation6], %s24
      %s27 = sshll.u32 [#allocation5], 4
      %s28 = int_to_ptr.vmem [resolvable:$true] %s27
      %30 = dma.hbm_to_vmem [thread:$0]  %s1, 128, %s28, [#allocation6]
    $region9: #{tpu_custom_call.1} parent=1 // pred_fallthru
      _
    // Predicated region
    $region10: #{tpu_custom_call.1} parent=1 // pred_check
      _
    $region11: #{tpu_custom_call.1} parent=1 // pred_check_branch
      %32 = sbr.rel (0) target = $region13
    $region12: #{tpu_custom_call.1} parent=1 // pred_region
      %s34 = ssub.s32 128, 128
      %35 = vsyncadd [#allocation6], %s34
      %s37 = sshll.u32 [#allocation7], 4
      %s38 = int_to_ptr.vmem [resolvable:$true] %s37
      %40 = dma.hbm_to_vmem [thread:$0]  %s2, 128, %s38, [#allocation6]
    $region13: #{tpu_custom_call.1} parent=1 // pred_fallthru
      _
    // Predicated region
    $region14: #{tpu_custom_call.1} parent=1 // pred_check
      _
    $region15: #{tpu_custom_call.1} parent=1 // pred_check_branch
      %42 = sbr.rel (0) target = $region17
    $region16: #{tpu_custom_call.1} parent=1 // pred_region
      %43 = dma.done [#allocation3], 256
    $region17: #{tpu_custom_call.1} parent=1 // pred_fallthru
      _
    // Predicated region
    $region18: #{tpu_custom_call.1} parent=1 // pred_check
      _
    $region19: #{tpu_custom_call.1} parent=1 // pred_check_branch
      %45 = sbr.rel (0) target = $region21
    $region20: #{tpu_custom_call.1} parent=1 // pred_region
      %46 = dma.done [#allocation6], 128
    $region21: #{tpu_custom_call.1} parent=1 // pred_fallthru
      _
    // Predicated region
    $region22: #{tpu_custom_call.1} parent=1 // pred_check
      _
    $region23: #{tpu_custom_call.1} parent=1 // pred_check_branch
      %48 = sbr.rel (0) target = $region25
    $region24: #{tpu_custom_call.1} parent=1 // pred_region
      %49 = dma.done [#allocation6], 128
    $region25: #{tpu_custom_call.1} parent=1 // pred_fallthru
      _
    %v50 = vld [vmem:[#allocation2] sm:$0xff]
    %v51 = vld [vmem:[#allocation2 + $0x8] sm:$0xff]
    %v52 = vld [vmem:[#allocation5] sm:$0xff]
    %v53 = vld [vmem:[#allocation7] sm:$0xff]
    %v55 = vlaneseq
    %v56 = vshrl.u32 %v55, 7
    %v57 = vsub.s32 0, %v56
    %v58 = vrot.slane %v52, %v57
    %v59 = vlaneseq
    %v60 = vshrl.u32 %v59, 7
    %v61 = vsub.s32 1, %v60
    %v62 = vrot.slane %v52, %v61
    %v63 = vlaneseq
    %v64 = vshrl.u32 %v63, 7
    %v65 = vsub.s32 2, %v64
    %v66 = vrot.slane %v52, %v65
    %v67 = vlaneseq
    %v68 = vshrl.u32 %v67, 7
    %v69 = vsub.s32 3, %v68
    %v70 = vrot.slane %v52, %v69
    %v71 = vlaneseq
    %v72 = vshrl.u32 %v71, 7
    %v73 = vsub.s32 4, %v72
    %v74 = vrot.slane %v52, %v73
    %v75 = vlaneseq
    %v76 = vshrl.u32 %v75, 7
    %v77 = vsub.s32 5, %v76
    %v78 = vrot.slane %v52, %v77
    %v79 = vlaneseq
    %v80 = vshrl.u32 %v79, 7
    %v81 = vsub.s32 6, %v80
    %v82 = vrot.slane %v52, %v81
    %v83 = vlaneseq
    %v84 = vshrl.u32 %v83, 7
    %v85 = vsub.s32 7, %v84
    %v86 = vrot.slane %v52, %v85
    %v87 = vcombine.low %v58, %v62
    %v88 = vcombine.low %v66, %v70
    %v90 = vunpack.c.l.s4 1983009808
    %v91 = vunpack.c.0.s8 %v90
    %v92 = vlaneseq
    %v93 = vshrl.u32 %v92, 7
    %v94 = vsub.s32 %v91, %v93
    %v95 = vrot.slane %v87, %v94
    %v97 = vunpack.c.l.s4 1983009808
    %v98 = vunpack.c.0.s8 %v97
    %v99 = vlaneseq
    %v100 = vshrl.u32 %v99, 7
    %v101 = vsub.s32 %v98, %v100
    %v102 = vrot.slane %v88, %v101
    %v103 = vcombine.low %v95, %v102
    %v104 = vcombine.low %v74, %v78
    %v105 = vcombine.low %v82, %v86
    %v107 = vunpack.c.l.s4 1983009808
    %v108 = vunpack.c.0.s8 %v107
    %v109 = vlaneseq
    %v110 = vshrl.u32 %v109, 7
    %v111 = vsub.s32 %v108, %v110
    %v112 = vrot.slane %v104, %v111
    %v114 = vunpack.c.l.s4 1983009808
    %v115 = vunpack.c.0.s8 %v114
    %v116 = vlaneseq
    %v117 = vshrl.u32 %v116, 7
    %v118 = vsub.s32 %v115, %v117
    %v119 = vrot.slane %v105, %v118
    %v120 = vcombine.low %v112, %v119
    %v123 = vsub.f32 %v50, %v103
    %v124 = vsub.f32 %v51, %v120
    %v125 = vmul.f32 %v53, %v53
    %v126 = vmul.f32 %v125, 2.0
    %v127 = vmul.f32 %v123, %v123
    %v128 = vmul.f32 %v124, %v124
    %v129 = vsub.f32 0.0, %v127
    %v130 = vsub.f32 0.0, %v128
    %v132 = vlaneseq
    %v133 = vshrl.u32 %v132, 7
    %v134 = vsub.s32 0, %v133
    %v135 = vrot.slane %v126, %v134
    %v136 = vlaneseq
    %v137 = vshrl.u32 %v136, 7
    %v138 = vsub.s32 1, %v137
    %v139 = vrot.slane %v126, %v138
    %v140 = vlaneseq
    %v141 = vshrl.u32 %v140, 7
    %v142 = vsub.s32 2, %v141
    %v143 = vrot.slane %v126, %v142
    %v144 = vlaneseq
    %v145 = vshrl.u32 %v144, 7
    %v146 = vsub.s32 3, %v145
    %v147 = vrot.slane %v126, %v146
    %v148 = vlaneseq
    %v149 = vshrl.u32 %v148, 7
    %v150 = vsub.s32 4, %v149
    %v151 = vrot.slane %v126, %v150
    %v152 = vlaneseq
    %v153 = vshrl.u32 %v152, 7
    %v154 = vsub.s32 5, %v153
    %v155 = vrot.slane %v126, %v154
    %v156 = vlaneseq
    %v157 = vshrl.u32 %v156, 7
    %v158 = vsub.s32 6, %v157
    %v159 = vrot.slane %v126, %v158
    %v160 = vlaneseq
    %v161 = vshrl.u32 %v160, 7
    %v162 = vsub.s32 7, %v161
    %v163 = vrot.slane %v126, %v162
    %v164 = vcombine.low %v135, %v139
    %v165 = vcombine.low %v143, %v147
    %v167 = vunpack.c.l.s4 1983009808
    %v168 = vunpack.c.0.s8 %v167
    %v169 = vlaneseq
    %v170 = vshrl.u32 %v169, 7
    %v171 = vsub.s32 %v168, %v170
    %v172 = vrot.slane %v164, %v171
    %v174 = vunpack.c.l.s4 1983009808
    %v175 = vunpack.c.0.s8 %v174
    %v176 = vlaneseq
    %v177 = vshrl.u32 %v176, 7
    %v178 = vsub.s32 %v175, %v177
    %v179 = vrot.slane %v165, %v178
    %v180 = vcombine.low %v172, %v179
    %v181 = vcombine.low %v151, %v155
    %v182 = vcombine.low %v159, %v163
    %v184 = vunpack.c.l.s4 1983009808
    %v185 = vunpack.c.0.s8 %v184
    %v186 = vlaneseq
    %v187 = vshrl.u32 %v186, 7
    %v188 = vsub.s32 %v185, %v187
    %v189 = vrot.slane %v181, %v188
    %v191 = vunpack.c.l.s4 1983009808
    %v192 = vunpack.c.0.s8 %v191
    %v193 = vlaneseq
    %v194 = vshrl.u32 %v193, 7
    %v195 = vsub.s32 %v192, %v194
    %v196 = vrot.slane %v182, %v195
    %v197 = vcombine.low %v189, %v196
    %v200 = vrcp.pop %v180
    %v201 = vmul.f32 %v129, %v200
    %v202 = vrcp.pop %v197
    %v203 = vmul.f32 %v130, %v202
    %v204 = vlog2.pop %v53
    %v205 = vmul.f32 %v204, 0.6931472
    %v207 = vlaneseq
    %v208 = vshrl.u32 %v207, 7
    %v209 = vsub.s32 0, %v208
    %v210 = vrot.slane %v205, %v209
    %v211 = vlaneseq
    %v212 = vshrl.u32 %v211, 7
    %v213 = vsub.s32 1, %v212
    %v214 = vrot.slane %v205, %v213
    %v215 = vlaneseq
    %v216 = vshrl.u32 %v215, 7
    %v217 = vsub.s32 2, %v216
    %v218 = vrot.slane %v205, %v217
    %v219 = vlaneseq
    %v220 = vshrl.u32 %v219, 7
    %v221 = vsub.s32 3, %v220
    %v222 = vrot.slane %v205, %v221
    %v223 = vlaneseq
    %v224 = vshrl.u32 %v223, 7
    %v225 = vsub.s32 4, %v224
    %v226 = vrot.slane %v205, %v225
    %v227 = vlaneseq
    %v228 = vshrl.u32 %v227, 7
    %v229 = vsub.s32 5, %v228
    %v230 = vrot.slane %v205, %v229
    %v231 = vlaneseq
    %v232 = vshrl.u32 %v231, 7
    %v233 = vsub.s32 6, %v232
    %v234 = vrot.slane %v205, %v233
    %v235 = vlaneseq
    %v236 = vshrl.u32 %v235, 7
    %v237 = vsub.s32 7, %v236
    %v238 = vrot.slane %v205, %v237
    %v239 = vcombine.low %v210, %v214
    %v240 = vcombine.low %v218, %v222
    %v242 = vunpack.c.l.s4 1983009808
    %v243 = vunpack.c.0.s8 %v242
    %v244 = vlaneseq
    %v245 = vshrl.u32 %v244, 7
    %v246 = vsub.s32 %v243, %v245
    %v247 = vrot.slane %v239, %v246
    %v249 = vunpack.c.l.s4 1983009808
    %v250 = vunpack.c.0.s8 %v249
    %v251 = vlaneseq
    %v252 = vshrl.u32 %v251, 7
    %v253 = vsub.s32 %v250, %v252
    %v254 = vrot.slane %v240, %v253
    %v255 = vcombine.low %v247, %v254
    %v256 = vcombine.low %v226, %v230
    %v257 = vcombine.low %v234, %v238
    %v259 = vunpack.c.l.s4 1983009808
    %v260 = vunpack.c.0.s8 %v259
    %v261 = vlaneseq
    %v262 = vshrl.u32 %v261, 7
    %v263 = vsub.s32 %v260, %v262
    %v264 = vrot.slane %v256, %v263
    %v266 = vunpack.c.l.s4 1983009808
    %v267 = vunpack.c.0.s8 %v266
    %v268 = vlaneseq
    %v269 = vshrl.u32 %v268, 7
    %v270 = vsub.s32 %v267, %v269
    %v271 = vrot.slane %v257, %v270
    %v272 = vcombine.low %v264, %v271
    %v275 = vsub.f32 %v201, %v255
    %v276 = vsub.f32 %v203, %v272
    %v277 = vsub.f32 %v275, 0.9189385
    %v278 = vsub.f32 %v276, 0.9189385
    %279 = vst [vmem:[#allocation8] sm:$0xff] %v277
    %280 = vst [vmem:[#allocation8 + $0x8] sm:$0xff] %v278
    // Predicated region
    $region26: #{tpu_custom_call.1} parent=1 // pred_check
      _
    $region27: #{tpu_custom_call.1} parent=1 // pred_check_branch
      %282 = sbr.rel (0) target = $region29
    $region28: #{tpu_custom_call.1} parent=1 // pred_region
      %s284 = ssub.s32 256, 256
      %285 = vsyncadd [#allocation4], %s284
      %s287 = sshll.u32 [#allocation8], 4
      %s288 = int_to_ptr.vmem [resolvable:$true] %s287
      %290 = dma.vmem_to_hbm [thread:$0]  %s288, 256, %s3, [#allocation4]
    $region29: #{tpu_custom_call.1} parent=1 // pred_fallthru
      _
    // Predicated region
    $region30: #{tpu_custom_call.1} parent=1 // pred_check
      _
    $region31: #{tpu_custom_call.1} parent=1 // pred_check_branch
      %292 = sbr.rel (0) target = $region33
    $region32: #{tpu_custom_call.1} parent=1 // pred_region
      %293 = dma.done [#allocation4], 256
    $region33: #{tpu_custom_call.1} parent=1 // pred_fallthru
      _
    %294 = vsyncpa [#allocation3], 1
    %295 = vsyncpa [#allocation6], 1
    %296 = vsyncpa [#allocation4], 1

</llo_original>
